<compile_context>
chip_gen: v7x
topology: tpu7x:2x2x1
jax: 0.10.0
libtpu: 0.0.40
codegen_flags: <defaults>
</compile_context>

<pallas_src>
import numpy as np

import jax
import jax.numpy as jnp
from jax import lax
from jax.experimental import pallas as pl
from jax.experimental.pallas import tpu as pltpu

# ----------------------- small synthetic configuration -----------------------
B = 2              # batch
C_IN = 8           # in_channels
C_OUT = 4          # out_channels of the fixed conv
H = W = 16         # spatial
KS = 3             # adaptive (per-sample) kernel size == fixed kernel size
N_GROUPS = 2       # n_groups
CG = C_IN // N_GROUPS
HW = H * W
EPS = 1e-5

PADDING = (KS - 1) // 2            # = 1 (ceil == floor for odd KS)
Hp = H + 2 * PADDING               # 18
Wp = W + 2 * PADDING               # 18
HPWP = Hp * Wp                     # 324 (flat padded frame)
HWP = H * Wp                       # 288 (output computed on the [H, Wp] grid)
T = KS * KS                        # 9 taps
TC = T * C_IN                      # 72  (contraction size)
CP = 8                             # fixed-conv out channels padded to a full sublane group
LP = 384                           # lane-dense flat length (3 x 128)

TAP_SHIFTS = tuple(kh * Wp + kw for kh in range(KS) for kw in range(KS))
MAX_SHIFT = TAP_SHIFTS[-1]         # 38
FRAME_OFF = Wp + 1                 # 19: padded-frame interior index = y-grid index + 19
STAGE1_SHIFTS = tuple((FRAME_OFF - s) % LP for s in TAP_SHIFTS)   # roll amounts, stage 1
STAGE2_SHIFTS = tuple((-s) % LP for s in TAP_SHIFTS)              # roll amounts, stage 2

# --- static invariants tying LP / MAX_SHIFT / HWP / the trim together -----------------
assert C_IN % N_GROUPS == 0 and CP >= C_OUT and LP % 128 == 0 and LP >= HPWP
# Real stage-2 output pixels (p = h*Wp + w, w < W) only read inside the padded frame:
assert (H - 1) * Wp + (W - 1) + MAX_SHIFT < HPWP
# Stage-2 circular-roll wrap-around can only hit output lanes >= LP - MAX_SHIFT, all of
# which lie in the trimmed tail (>= HWP):
assert LP - MAX_SHIFT >= HWP
# Stage-1 wrap-around only hits lanes below FRAME_OFF (overwritten by the reflect border
# fill) or beyond the last interior lane of the padded frame:
assert LP + FRAME_OFF - MAX_SHIFT > (Hp - 2) * Wp + (Wp - 2)

# Block-diagonal group mask (compile-time constant used only in the weight-fold glue).
_GROUP_MASK_NP = np.kron(np.eye(N_GROUPS, dtype=np.float32),
                         np.ones((CG, CG), np.float32))            # [C_IN, C_IN]


# --------------- fused kernel: IN + adaptive conv + reflect pad + fixed conv -----------
def adaconv_fused_kernel(x_ref, w1_ref, w2_ref, beff_ref, o_ref):
    # x_ref   : [1, C_IN, LP]  f32  reflect-padded raw input, flattened (zero tail)
    # w1_ref  : [1, C_IN, TC]  bf16 folded adaptive weight (pointwise @ spatial, block-diag)
    # w2_ref  : [CP, TC]       bf16 folded fixed conv weight (rows >= C_OUT are zero)
    # beff_ref: [1, CP, 1]     f32  folded (adaptive + fixed) bias, added after stage 2
    # o_ref   : [1, CP, LP]    f32  final output over the padded lane grid (trimmed in glue)
    xp = x_ref[0]                                          # [C_IN, LP] f32
    w1 = w1_ref[0]                                         # [C_IN, TC] bf16
    w2 = w2_ref[...]                                       # [CP, TC]   bf16
    beff = beff_ref[0]                                     # [CP, 1]    f32

    # Flat padded-frame coordinates of every lane (f32 arithmetic is exact here; the +0.5
    # guards the floor against rounding of the 1/Wp reciprocal).
    idx = lax.broadcasted_iota(jnp.int32, (1, LP), 1).astype(jnp.float32)
    row = jnp.floor((idx + 0.5) * jnp.float32(1.0 / Wp))
    col = idx - row * jnp.float32(Wp)
    interior = ((row >= 1.0) & (row <= float(H)) & (col >= 1.0) & (col <= float(W)))
    mask = interior.astype(jnp.float32)                    # [1, LP], exactly H*W ones

    # Instance norm over the interior (biased variance, like F.instance_norm).  Normalizing
    # the whole padded buffer == reflect-padding the normalized input.
    inv_n = jnp.float32(1.0 / HW)
    mean = jnp.sum(xp * mask, axis=1, keepdims=True) * inv_n          # [C_IN, 1]
    xc = (xp - mean) * mask
    var = jnp.sum(xc * xc, axis=1, keepdims=True) * inv_n             # [C_IN, 1]
    xn = (xp - mean) * lax.rsqrt(var + EPS)                           # [C_IN, LP] f32

    # ---- stage 1: adaptive grouped conv (pointwise + bias folded), frame-aligned ----
    # Tap (kh, kw): output lane i reads xn[(i - (Wp+1) + kh*Wp + kw) mod LP], so the dot
    # lands y directly at the INTERIOR of the padded [Hp, Wp] frame (flat index i).
    taps1 = [xn if sh == 0 else pltpu.roll(xn, shift=sh, axis=1) for sh in STAGE1_SHIFTS]
    patches1 = jnp.concatenate(taps1, axis=0).astype(jnp.bfloat16)    # [TC, LP]
    y = jnp.dot(w1, patches1, preferred_element_type=jnp.float32)     # [C_IN, LP] f32

    # ---- in-kernel 1-px reflect padding of y on the [Hp, Wp] frame (cols, then rows) ----
    yc = jnp.where(col == 0.0, pltpu.roll(y, shift=LP - 2, axis=1), y)          # y[i+2]
    yc = jnp.where(col == float(Wp - 1), pltpu.roll(y, shift=2, axis=1), yc)    # y[i-2]
    ypad = jnp.where(row == 0.0, pltpu.roll(yc, shift=LP - 2 * Wp, axis=1), yc)     # yc[i+2*Wp]
    ypad = jnp.where(row == float(Hp - 1), pltpu.roll(yc, shift=2 * Wp, axis=1), ypad)

    # ---- stage 2: fixed shared 3x3 conv over the reflect-padded frame ----
    taps2 = [ypad if sh == 0 else pltpu.roll(ypad, shift=sh, axis=1) for sh in STAGE2_SHIFTS]
    patches2 = jnp.concatenate(taps2, axis=0).astype(jnp.bfloat16)    # [TC, LP]
    o_ref[0] = jnp.dot(w2, patches2, preferred_element_type=jnp.float32) + beff


def _adaconv_fused_call(xpf, w1, w2, beff):
    return pl.pallas_call(
        adaconv_fused_kernel,
        out_shape=jax.ShapeDtypeStruct((B, CP, LP), jnp.float32),
        grid=(B,),
        in_specs=[
            pl.BlockSpec((1, C_IN, LP), lambda b: (b, 0, 0)),
            pl.BlockSpec((1, C_IN, TC), lambda b: (b, 0, 0)),
            pl.BlockSpec((CP, TC), lambda b: (0, 0)),
            pl.BlockSpec((1, CP, 1), lambda b: (b, 0, 0)),
        ],
        out_specs=pl.BlockSpec((1, CP, LP), lambda b: (b, 0, 0)),
        compiler_params=pltpu.CompilerParams(dimension_semantics=("parallel",)),
    )(xpf, w1, w2, beff)


# --------------------------------- JAX glue -----------------------------------
def _reflect_pad_flat(x4):
    # [B, C, H, W] -> reflect pad 1px -> flatten the [Hp, Wp] frame -> zero lane tail to LP
    xp = jnp.pad(x4, ((0, 0), (0, 0), (PADDING, PADDING), (PADDING, PADDING)),
                 mode="reflect")
    xf = xp.reshape(x4.shape[0], x4.shape[1], HPWP)
    return jnp.pad(xf, ((0, 0), (0, 0), (0, LP - HPWP)))


def _fold_weights(w_spatial, w_pointwise, bias, conv_w, conv_b):
    # w_spatial: [B, C_IN, CG, KS, KS], w_pointwise: [B, C_IN, CG, 1, 1], bias: [B, C_IN]
    # conv_w: [C_OUT, C_IN, KS, KS], conv_b: [C_OUT]
    hp = lax.Precision.HIGHEST
    gm = jnp.asarray(_GROUP_MASK_NP)                                   # [C_IN, C_IN]

    # Block-diagonal per-sample pointwise weight  P[b, c_out, m_global].
    P = jnp.tile(w_pointwise[:, :, :, 0, 0], (1, 1, N_GROUPS)) * gm    # [B, C_IN, C_IN]
    # Block-diagonal per-sample spatial weight flattened to columns k = t*C_IN + c_in.
    S = jnp.tile(w_spatial, (1, 1, N_GROUPS, 1, 1)) * gm[None, :, :, None, None]
    S = jnp.transpose(S, (0, 1, 3, 4, 2)).reshape(B, C_IN, TC)
    # One batched dot folds pointwise @ spatial -> W1[b, c_out, t*C_IN + c_in].
    w1 = jnp.einsum("bcm,bmk->bck", P, S, precision=hp).astype(jnp.bfloat16)

    # Fixed conv weight: columns k = t*C_IN + c_in, out-channel rows zero-padded to CP.
    w2 = jnp.transpose(conv_w, (0, 2, 3, 1)).reshape(C_OUT, TC)
    w2 = jnp.pad(w2, ((0, CP - C_OUT), (0, 0))).astype(jnp.bfloat16)   # [CP, TC]

    # Both biases folded into ONE constant added after the fixed conv:
    #   conv2(reflect_pad(y0 + pb)) + b2 == conv2(reflect_pad(y0)) + sum_taps(conv_w) @ pb + b2
    pb = jnp.einsum("bcm,bm->bc", P, bias, precision=hp)               # [B, C_IN]
    w2sum = jnp.sum(conv_w, axis=(2, 3))                               # [C_OUT, C_IN]
    beff = conv_b[None, :] + jnp.einsum("bc,oc->bo", pb, w2sum, precision=hp)
    beff = jnp.pad(beff, ((0, 0), (0, CP - C_OUT)))[:, :, None]        # [B, CP, 1] f32
    return w1, w2, beff


@jax.jit
def adaconv2d_forward(x, w_spatial, w_pointwise, bias, conv_w, conv_b):
    w1, w2, beff = _fold_weights(w_spatial, w_pointwise, bias, conv_w, conv_b)
    xpf = _reflect_pad_flat(x)                              # [B, C_IN, LP]
    out = _adaconv_fused_call(xpf, w1, w2, beff)            # [B, CP, LP]
    # Trim: keep real out-channels, drop the lane tail and the 2 garbage columns per row.
    out = out[:, :C_OUT, :HWP].reshape(B, C_OUT, H, Wp)[:, :, :, :W]
    return out


# ------------------------------ pure-JAX reference -----------------------------
def reference_forward(x, w_spatial, w_pointwise, bias, conv_w, conv_b):
    dn = ("NCHW", "OIHW", "NCHW")
    mean = x.mean(axis=(2, 3), keepdims=True)
    var = ((x - mean) ** 2).mean(axis=(2, 3), keepdims=True)
    xn = (x - mean) / jnp.sqrt(var + EPS)
    ys = []
    for i in range(B):
        xi = jnp.pad(xn[i:i + 1], ((0, 0), (0, 0), (1, 1), (1, 1)), mode="reflect")
        yi = lax.conv_general_dilated(xi, w_spatial[i], (1, 1), "VALID",
                                      dimension_numbers=dn, feature_group_count=N_GROUPS,
                                      precision=lax.Precision.HIGHEST)
        yi = yi + bias[i][None, :, None, None]
        yi = lax.conv_general_dilated(yi, w_pointwise[i], (1, 1), "VALID",
                                      dimension_numbers=dn, feature_group_count=N_GROUPS,
                                      precision=lax.Precision.HIGHEST)
        ys.append(yi)
    ys = jnp.concatenate(ys, axis=0)
    ysp = jnp.pad(ys, ((0, 0), (0, 0), (1, 1), (1, 1)), mode="reflect")
    out = lax.conv_general_dilated(ysp, conv_w, (1, 1), "VALID",
                                   dimension_numbers=dn, precision=lax.Precision.HIGHEST)
    return out + conv_b[None, :, None, None]


if __name__ == "__main__":
    key = jax.random.PRNGKey(0)
    k = jax.random.split(key, 6)
    x = jax.random.normal(k[0], (B, C_IN, H, W), jnp.float32)
    # per-sample adaptive weights (normally produced by a kernel predictor)
    w_spatial = 0.2 * jax.random.normal(k[1], (B, C_IN, CG, KS, KS), jnp.float32)
    w_pointwise = 0.2 * jax.random.normal(k[2], (B, C_IN, CG, 1, 1), jnp.float32)
    bias = 0.2 * jax.random.normal(k[3], (B, C_IN), jnp.float32)
    # fixed nn.Conv2d parameters (deterministic synthetic init)
    conv_w = 0.2 * jax.random.normal(k[4], (C_OUT, C_IN, KS, KS), jnp.float32)
    conv_b = 0.2 * jax.random.normal(k[5], (C_OUT,), jnp.float32)

    out = adaconv2d_forward(x, w_spatial, w_pointwise, bias, conv_w, conv_b)
    out = jax.block_until_ready(out)
    assert out.shape == (B, C_OUT, H, W)

    ref = jax.block_until_ready(
        reference_forward(x, w_spatial, w_pointwise, bias, conv_w, conv_b))
    # bf16 MXU inputs (f32 accumulation) -> bf16-class error vs the HIGHEST-precision ref.
    np.testing.assert_allclose(np.asarray(out), np.asarray(ref), atol=5e-2, rtol=5e-2)

    print("KERNEL_OK")
</pallas_src>

<mosaic_0001>
module attributes {stable_mosaic.version = 11 : i64} {
  func.func @adaconv_fused_kernel(%arg0: i32, %arg1: memref<1x8x384xf32, #tpu.memory_space<vmem>>, %arg2: memref<1x8x72xbf16, #tpu.memory_space<vmem>>, %arg3: memref<8x72xbf16, #tpu.memory_space<vmem>>, %arg4: memref<1x8x1xf32, #tpu.memory_space<vmem>>, %arg5: memref<1x8x384xf32, #tpu.memory_space<vmem>>) attributes {dimension_semantics = [#tpu.dimension_semantics<parallel>], iteration_bounds = array<i64: 2>, scalar_prefetch = 0 : i64, scratch_operands = 0 : i64, tpu.core_type = #tpu.core_type<tc>, window_params = [{transform_indices = @transform_0, window_bounds = array<i64: 1, 8, 384>}, {transform_indices = @transform_1, window_bounds = array<i64: 1, 8, 72>}, {pipeline_mode = #tpu.pipeline_mode<synchronous>, transform_indices = @transform_2, window_bounds = array<i64: 8, 72>}, {transform_indices = @transform_3, window_bounds = array<i64: 1, 8, 1>}, {transform_indices = @transform_4, window_bounds = array<i64: 1, 8, 384>}]} {
    %c0 = arith.constant 0 : index
    %c0_0 = arith.constant 0 : index
    %c0_1 = arith.constant 0 : index
    %0 = vector.load %arg1[%c0, %c0_0, %c0_1] : memref<1x8x384xf32, #tpu.memory_space<vmem>>, vector<1x8x384xf32>
    %1 = vector.shape_cast %0 : vector<1x8x384xf32> to vector<8x384xf32>
    %c0_2 = arith.constant 0 : index
    %c0_3 = arith.constant 0 : index
    %c0_4 = arith.constant 0 : index
    %2 = vector.load %arg2[%c0_2, %c0_3, %c0_4] : memref<1x8x72xbf16, #tpu.memory_space<vmem>>, vector<1x8x72xbf16>
    %3 = vector.shape_cast %2 : vector<1x8x72xbf16> to vector<8x72xbf16>
    %c0_5 = arith.constant 0 : index
    %c0_6 = arith.constant 0 : index
    %4 = vector.load %arg3[%c0_5, %c0_6] : memref<8x72xbf16, #tpu.memory_space<vmem>>, vector<8x72xbf16>
    %c0_7 = arith.constant 0 : index
    %c0_8 = arith.constant 0 : index
    %c0_9 = arith.constant 0 : index
    %5 = vector.load %arg4[%c0_7, %c0_8, %c0_9] : memref<1x8x1xf32, #tpu.memory_space<vmem>>, vector<1x8x1xf32>
    %6 = vector.shape_cast %5 : vector<1x8x1xf32> to vector<8x1xf32>
    %7 = tpu.iota {dimensions = array<i32: 1>} : vector<1x384xi32>
    %8 = arith.sitofp %7 : vector<1x384xi32> to vector<1x384xf32>
    %cst = arith.constant 5.000000e-01 : f32
    %9 = vector.broadcast %cst : f32 to vector<1x384xf32>
    %10 = arith.addf %8, %9 : vector<1x384xf32>
    %cst_10 = arith.constant 0.055555556 : f32
    %11 = vector.broadcast %cst_10 : f32 to vector<1x384xf32>
    %12 = arith.mulf %10, %11 : vector<1x384xf32>
    %13 = math.floor %12 : vector<1x384xf32>
    %cst_11 = arith.constant 1.800000e+01 : f32
    %14 = vector.broadcast %cst_11 : f32 to vector<1x384xf32>
    %15 = arith.mulf %13, %14 : vector<1x384xf32>
    %16 = arith.subf %8, %15 : vector<1x384xf32>
    %cst_12 = arith.constant 1.000000e+00 : f32
    %17 = vector.broadcast %cst_12 : f32 to vector<1x384xf32>
    %18 = arith.cmpf oge, %13, %17 : vector<1x384xf32>
    %cst_13 = arith.constant 1.600000e+01 : f32
    %19 = vector.broadcast %cst_13 : f32 to vector<1x384xf32>
    %20 = arith.cmpf ole, %13, %19 : vector<1x384xf32>
    %21 = arith.andi %18, %20 : vector<1x384xi1>
    %cst_14 = arith.constant 1.000000e+00 : f32
    %22 = vector.broadcast %cst_14 : f32 to vector<1x384xf32>
    %23 = arith.cmpf oge, %16, %22 : vector<1x384xf32>
    %24 = arith.andi %21, %23 : vector<1x384xi1>
    %cst_15 = arith.constant 1.600000e+01 : f32
    %25 = vector.broadcast %cst_15 : f32 to vector<1x384xf32>
    %26 = arith.cmpf ole, %16, %25 : vector<1x384xf32>
    %27 = arith.andi %24, %26 : vector<1x384xi1>
    %28 = arith.extui %27 : vector<1x384xi1> to vector<1x384xi32>
    %29 = arith.sitofp %28 : vector<1x384xi32> to vector<1x384xf32>
    %30 = vector.broadcast %29 : vector<1x384xf32> to vector<8x384xf32>
    %31 = arith.mulf %1, %30 : vector<8x384xf32>
    %cst_16 = arith.constant dense<0.000000e+00> : vector<8xf32>
    %32 = vector.multi_reduction <add>, %31, %cst_16 [1] : vector<8x384xf32> to vector<8xf32>
    %33 = vector.shape_cast %32 : vector<8xf32> to vector<8x1xf32>
    %cst_17 = arith.constant 3.906250e-03 : f32
    %34 = vector.broadcast %cst_17 : f32 to vector<8x1xf32>
    %35 = arith.mulf %33, %34 : vector<8x1xf32>
    %36 = vector.broadcast %35 : vector<8x1xf32> to vector<8x384xf32>
    %37 = arith.subf %1, %36 : vector<8x384xf32>
    %38 = vector.broadcast %29 : vector<1x384xf32> to vector<8x384xf32>
    %39 = arith.mulf %37, %38 : vector<8x384xf32>
    %40 = arith.mulf %39, %39 : vector<8x384xf32>
    %cst_18 = arith.constant dense<0.000000e+00> : vector<8xf32>
    %41 = vector.multi_reduction <add>, %40, %cst_18 [1] : vector<8x384xf32> to vector<8xf32>
    %42 = vector.shape_cast %41 : vector<8xf32> to vector<8x1xf32>
    %cst_19 = arith.constant 3.906250e-03 : f32
    %43 = vector.broadcast %cst_19 : f32 to vector<8x1xf32>
    %44 = arith.mulf %42, %43 : vector<8x1xf32>
    %45 = vector.broadcast %35 : vector<8x1xf32> to vector<8x384xf32>
    %46 = arith.subf %1, %45 : vector<8x384xf32>
    %cst_20 = arith.constant 9.99999974E-6 : f32
    %47 = vector.broadcast %cst_20 : f32 to vector<8x1xf32>
    %48 = arith.addf %44, %47 : vector<8x1xf32>
    %49 = math.rsqrt %48 : vector<8x1xf32>
    %50 = vector.broadcast %49 : vector<8x1xf32> to vector<8x384xf32>
    %51 = arith.mulf %46, %50 : vector<8x384xf32>
    %c19_i32 = arith.constant 19 : i32
    %52 = tpu.dynamic_rotate %51 by %c19_i32 dim 1 : vector<8x384xf32>, i32 -> vector<8x384xf32>
    %c18_i32 = arith.constant 18 : i32
    %53 = tpu.dynamic_rotate %51 by %c18_i32 dim 1 : vector<8x384xf32>, i32 -> vector<8x384xf32>
    %c17_i32 = arith.constant 17 : i32
    %54 = tpu.dynamic_rotate %51 by %c17_i32 dim 1 : vector<8x384xf32>, i32 -> vector<8x384xf32>
    %c1_i32 = arith.constant 1 : i32
    %55 = tpu.dynamic_rotate %51 by %c1_i32 dim 1 : vector<8x384xf32>, i32 -> vector<8x384xf32>
    %c383_i32 = arith.constant 383 : i32
    %56 = tpu.dynamic_rotate %51 by %c383_i32 dim 1 : vector<8x384xf32>, i32 -> vector<8x384xf32>
    %c367_i32 = arith.constant 367 : i32
    %57 = tpu.dynamic_rotate %51 by %c367_i32 dim 1 : vector<8x384xf32>, i32 -> vector<8x384xf32>
    %c366_i32 = arith.constant 366 : i32
    %58 = tpu.dynamic_rotate %51 by %c366_i32 dim 1 : vector<8x384xf32>, i32 -> vector<8x384xf32>
    %c365_i32 = arith.constant 365 : i32
    %59 = tpu.dynamic_rotate %51 by %c365_i32 dim 1 : vector<8x384xf32>, i32 -> vector<8x384xf32>
    %60 = tpu.concatenate %52, %53, %54, %55, %51, %56, %57, %58, %59 in 0 : vector<8x384xf32>, vector<8x384xf32>, vector<8x384xf32>, vector<8x384xf32>, vector<8x384xf32>, vector<8x384xf32>, vector<8x384xf32>, vector<8x384xf32>, vector<8x384xf32> -> vector<72x384xf32>
    %61 = arith.truncf %60 : vector<72x384xf32> to vector<72x384xbf16>
    %cst_21 = arith.constant dense<0.000000e+00> : vector<8x384xf32>
    %62 = tpu.matmul %3, %61, %cst_21 {dimension_numbers = #tpu.dot_dimension_numbers<[1], [0], [0], [1], [0, 0, 1, 1], [], []>} : vector<8x72xbf16>, vector<72x384xbf16>, vector<8x384xf32> -> vector<8x384xf32>
    %cst_22 = arith.constant 0.000000e+00 : f32
    %63 = vector.broadcast %cst_22 : f32 to vector<1x384xf32>
    %64 = arith.cmpf oeq, %16, %63 : vector<1x384xf32>
    %c382_i32 = arith.constant 382 : i32
    %65 = tpu.dynamic_rotate %62 by %c382_i32 dim 1 : vector<8x384xf32>, i32 -> vector<8x384xf32>
    %66 = vector.shape_cast %64 : vector<1x384xi1> to vector<1x384xi1>
    %67 = vector.broadcast %66 : vector<1x384xi1> to vector<8x384xi1>
    %68 = arith.select %67, %65, %62 : vector<8x384xi1>, vector<8x384xf32>
    %cst_23 = arith.constant 1.700000e+01 : f32
    %69 = vector.broadcast %cst_23 : f32 to vector<1x384xf32>
    %70 = arith.cmpf oeq, %16, %69 : vector<1x384xf32>
    %c2_i32 = arith.constant 2 : i32
    %71 = tpu.dynamic_rotate %62 by %c2_i32 dim 1 : vector<8x384xf32>, i32 -> vector<8x384xf32>
    %72 = vector.shape_cast %70 : vector<1x384xi1> to vector<1x384xi1>
    %73 = vector.broadcast %72 : vector<1x384xi1> to vector<8x384xi1>
    %74 = arith.select %73, %71, %68 : vector<8x384xi1>, vector<8x384xf32>
    %cst_24 = arith.constant 0.000000e+00 : f32
    %75 = vector.broadcast %cst_24 : f32 to vector<1x384xf32>
    %76 = arith.cmpf oeq, %13, %75 : vector<1x384xf32>
    %c348_i32 = arith.constant 348 : i32
    %77 = tpu.dynamic_rotate %74 by %c348_i32 dim 1 : vector<8x384xf32>, i32 -> vector<8x384xf32>
    %78 = vector.shape_cast %76 : vector<1x384xi1> to vector<1x384xi1>
    %79 = vector.broadcast %78 : vector<1x384xi1> to vector<8x384xi1>
    %80 = arith.select %79, %77, %74 : vector<8x384xi1>, vector<8x384xf32>
    %cst_25 = arith.constant 1.700000e+01 : f32
    %81 = vector.broadcast %cst_25 : f32 to vector<1x384xf32>
    %82 = arith.cmpf oeq, %13, %81 : vector<1x384xf32>
    %c36_i32 = arith.constant 36 : i32
    %83 = tpu.dynamic_rotate %74 by %c36_i32 dim 1 : vector<8x384xf32>, i32 -> vector<8x384xf32>
    %84 = vector.shape_cast %82 : vector<1x384xi1> to vector<1x384xi1>
    %85 = vector.broadcast %84 : vector<1x384xi1> to vector<8x384xi1>
    %86 = arith.select %85, %83, %80 : vector<8x384xi1>, vector<8x384xf32>
    %c383_i32_26 = arith.constant 383 : i32
    %87 = tpu.dynamic_rotate %86 by %c383_i32_26 dim 1 : vector<8x384xf32>, i32 -> vector<8x384xf32>
    %c382_i32_27 = arith.constant 382 : i32
    %88 = tpu.dynamic_rotate %86 by %c382_i32_27 dim 1 : vector<8x384xf32>, i32 -> vector<8x384xf32>
    %c366_i32_28 = arith.constant 366 : i32
    %89 = tpu.dynamic_rotate %86 by %c366_i32_28 dim 1 : vector<8x384xf32>, i32 -> vector<8x384xf32>
    %c365_i32_29 = arith.constant 365 : i32
    %90 = tpu.dynamic_rotate %86 by %c365_i32_29 dim 1 : vector<8x384xf32>, i32 -> vector<8x384xf32>
    %c364_i32 = arith.constant 364 : i32
    %91 = tpu.dynamic_rotate %86 by %c364_i32 dim 1 : vector<8x384xf32>, i32 -> vector<8x384xf32>
    %c348_i32_30 = arith.constant 348 : i32
    %92 = tpu.dynamic_rotate %86 by %c348_i32_30 dim 1 : vector<8x384xf32>, i32 -> vector<8x384xf32>
    %c347_i32 = arith.constant 347 : i32
    %93 = tpu.dynamic_rotate %86 by %c347_i32 dim 1 : vector<8x384xf32>, i32 -> vector<8x384xf32>
    %c346_i32 = arith.constant 346 : i32
    %94 = tpu.dynamic_rotate %86 by %c346_i32 dim 1 : vector<8x384xf32>, i32 -> vector<8x384xf32>
    %95 = tpu.concatenate %86, %87, %88, %89, %90, %91, %92, %93, %94 in 0 : vector<8x384xf32>, vector<8x384xf32>, vector<8x384xf32>, vector<8x384xf32>, vector<8x384xf32>, vector<8x384xf32>, vector<8x384xf32>, vector<8x384xf32>, vector<8x384xf32> -> vector<72x384xf32>
    %96 = arith.truncf %95 : vector<72x384xf32> to vector<72x384xbf16>
    %cst_31 = arith.constant dense<0.000000e+00> : vector<8x384xf32>
    %97 = tpu.matmul %4, %96, %cst_31 {dimension_numbers = #tpu.dot_dimension_numbers<[1], [0], [0], [1], [0, 0, 1, 1], [], []>} : vector<8x72xbf16>, vector<72x384xbf16>, vector<8x384xf32> -> vector<8x384xf32>
    %98 = vector.broadcast %6 : vector<8x1xf32> to vector<8x384xf32>
    %99 = arith.addf %97, %98 : vector<8x384xf32>
    %c0_32 = arith.constant 0 : index
    %c0_33 = arith.constant 0 : index
    %c0_34 = arith.constant 0 : index
    %100 = vector.load %arg5[%c0_32, %c0_33, %c0_34] : memref<1x8x384xf32, #tpu.memory_space<vmem>>, vector<1x8x384xf32>
    %101 = vector.shape_cast %100 : vector<1x8x384xf32> to vector<8x384xf32>
    %102 = vector.shape_cast %99 : vector<8x384xf32> to vector<1x8x384xf32>
    tpu.vector_store %arg5[%c0_32, %c0_33, %c0_34], %102 {strides = array<i32>} : memref<1x8x384xf32, #tpu.memory_space<vmem>>, vector<1x8x384xf32>,
    return
  }
  func.func @transform_0(%arg0: i32) -> (i32, i32, i32) {
    %c0_i32 = arith.constant 0 : i32
    %c0_i32_0 = arith.constant 0 : i32
    %c0_i32_1 = arith.constant 0 : i32
    return %arg0, %c0_i32, %c0_i32_0 : i32, i32, i32
  }
  func.func @transform_1(%arg0: i32) -> (i32, i32, i32) {
    %c0_i32 = arith.constant 0 : i32
    %c0_i32_0 = arith.constant 0 : i32
    %c0_i32_1 = arith.constant 0 : i32
    return %arg0, %c0_i32, %c0_i32_0 : i32, i32, i32
  }
  func.func @transform_2(%arg0: i32) -> (i32, i32) {
    %c0_i32 = arith.constant 0 : i32
    %c0_i32_0 = arith.constant 0 : i32
    %c0_i32_1 = arith.constant 0 : i32
    return %c0_i32, %c0_i32_0 : i32, i32
  }
  func.func @transform_3(%arg0: i32) -> (i32, i32, i32) {
    %c0_i32 = arith.constant 0 : i32
    %c0_i32_0 = arith.constant 0 : i32
    %c0_i32_1 = arith.constant 0 : i32
    return %arg0, %c0_i32, %c0_i32_0 : i32, i32, i32
  }
  func.func @transform_4(%arg0: i32) -> (i32, i32, i32) {
    %c0_i32 = arith.constant 0 : i32
    %c0_i32_0 = arith.constant 0 : i32
    %c0_i32_1 = arith.constant 0 : i32
    return %arg0, %c0_i32, %c0_i32_0 : i32, i32, i32
  }
}

</mosaic_0001>

<llo_original>
// kernel: adaconv2d_forward.1
$region0: #{adaconv2d_forward.1}
  #allocation0 [shape = 'u32[]', space=smem, size = 0x4, offset = 0x4, fixed_abs, tag = 'smem constant byte address 0x4 - core index']
  #allocation1 [shape = 'u32[144,128]{1,0:T(1,128)}', space=vmem, size = 0x12000, scoped, tag = 'internal scratch']
  %s0 = inlined_call_operand.vmem [shape: f32[2,8,384], index: 0, kind: input, shape index: {}]
  %s1 = inlined_call_operand.vmem [shape: bf16[2,8,72], index: 1, kind: input, shape index: {}]
  %s2 = inlined_call_operand.vmem [shape: bf16[8,72], index: 2, kind: input, shape index: {}]
  %s3 = inlined_call_operand.vmem [shape: f32[2,8,1], index: 3, kind: input, shape index: {}]
  %s4 = inlined_call_operand.vmem [shape: f32[2,8,384], index: 4, kind: output, shape index: {}]
  %s5 = sld [smem:[#allocation0]]
  $region49: #{adaconv2d_forward.1} parent=0
    _
  %s7 = ssub.s32 1, %s5
  %s8 = scalar_select 0, %s7, %s5
  loop: start=0, step=1, limit=4
  $region2: #{adaconv2d_forward.1} parent=0 // loop_pre_header
    _
  $region3: #{adaconv2d_forward.1} parent=0 // loop_header
    %s10 = sphi 0, %s14
    %p11 = scmp.ge.s32.totalorder %s10, 4
    %s20 = sphi 0, %s22
    %s23 = sphi 0, %s20
    %s24 = sphi 0, %s23
    %s40 = sphi 0, %s24
    %s46 = sphi 0, %s48
    %s49 = sphi 0, %s46
    %s50 = sphi 0, %s49
    %s66 = sphi 0, %s50
    %s70 = sphi 0, %s70
    %s72 = sphi 0, %s70
    %s73 = sphi 0, %s72
    %s87 = sphi 0, %s73
    %s93 = sphi 0, %s95
    %s96 = sphi 0, %s93
    %s97 = sphi 0, %s96
    %s113 = sphi 0, %s97
    %s119 = sphi 0, %s121
    %s122 = sphi 0, %s119
    %s123 = sphi 0, %s122
    %s139 = sphi 0, %s123
  $region4: #{adaconv2d_forward.1} parent=0 // loop_header_branch
    %13 = sbr.rel (%p11) target = $region8
  $region5: #{adaconv2d_forward.1} parent=0 // loop_body
    %s15 = ssub.s32 %s10, 1
    %s16 = ssub.s32 %s10, 2
    %s17 = sadd.s32 %s10, 1
    %s18 = ssub.s32 %s10, %s17
    %p19 = scmp.eq.s32.totalorder %s18, 0
    %s21 = sadd.s32 %s20, 1
    %s22 = scalar_select %p19, %s20, %s21
    %p25 = pneg %p19
    %p26 = scmp.eq.s32.totalorder %s10, 1
    %p27 = por %p25, %p26
    %p28 = scmp.ne.s32.totalorder %s20, %s23
    %p29 = scmp.eq.s32.totalorder %s10, 0
    %p30 = por %p28, %p29
    %p31 = scmp.ne.s32.totalorder %s20, %s23
    %p32 = scmp.eq.s32.totalorder %s15, 1
    %p33 = por %p31, %p32
    %p34 = scmp.ne.s32.totalorder %s23, %s24
    %p35 = scmp.eq.s32.totalorder %s15, 0
    %p36 = por %p34, %p35
    %p37 = scmp.ne.s32.totalorder %s23, %s24
    %p38 = scmp.eq.s32.totalorder %s16, 1
    %p39 = por %p37, %p38
    %p41 = scmp.ne.s32.totalorder %s24, %s40
    %p42 = scmp.eq.s32.totalorder %s16, 0
    %p43 = por %p41, %p42
    %s44 = ssub.s32 %s10, %s17
    %p45 = scmp.eq.s32.totalorder %s44, 0
    %s47 = sadd.s32 %s46, 1
    %s48 = scalar_select %p45, %s46, %s47
    %p51 = pneg %p45
    %p52 = scmp.eq.s32.totalorder %s10, 1
    %p53 = por %p51, %p52
    %p54 = scmp.ne.s32.totalorder %s46, %s49
    %p55 = scmp.eq.s32.totalorder %s10, 0
    %p56 = por %p54, %p55
    %p57 = scmp.ne.s32.totalorder %s46, %s49
    %p58 = scmp.eq.s32.totalorder %s15, 1
    %p59 = por %p57, %p58
    %p60 = scmp.ne.s32.totalorder %s49, %s50
    %p61 = scmp.eq.s32.totalorder %s15, 0
    %p62 = por %p60, %p61
    %p63 = scmp.ne.s32.totalorder %s49, %s50
    %p64 = scmp.eq.s32.totalorder %s16, 1
    %p65 = por %p63, %p64
    %p67 = scmp.ne.s32.totalorder %s50, %s66
    %p68 = scmp.eq.s32.totalorder %s16, 0
    %p69 = por %p67, %p68
    %s71 = sadd.s32 %s70, 1
    %p74 = scmp.eq.s32.totalorder %s10, 1
    %p75 = scmp.ne.s32.totalorder %s70, %s72
    %p76 = scmp.eq.s32.totalorder %s10, 0
    %p77 = por %p75, %p76
    %p78 = scmp.ne.s32.totalorder %s70, %s72
    %p79 = scmp.eq.s32.totalorder %s15, 1
    %p80 = por %p78, %p79
    %p81 = scmp.ne.s32.totalorder %s72, %s73
    %p82 = scmp.eq.s32.totalorder %s15, 0
    %p83 = por %p81, %p82
    %p84 = scmp.ne.s32.totalorder %s72, %s73
    %p85 = scmp.eq.s32.totalorder %s16, 1
    %p86 = por %p84, %p85
    %p88 = scmp.ne.s32.totalorder %s73, %s87
    %p89 = scmp.eq.s32.totalorder %s16, 0
    %p90 = por %p88, %p89
    %s91 = ssub.s32 %s10, %s17
    %p92 = scmp.eq.s32.totalorder %s91, 0
    %s94 = sadd.s32 %s93, 1
    %s95 = scalar_select %p92, %s93, %s94
    %p98 = pneg %p92
    %p99 = scmp.eq.s32.totalorder %s10, 1
    %p100 = por %p98, %p99
    %p101 = scmp.ne.s32.totalorder %s93, %s96
    %p102 = scmp.eq.s32.totalorder %s10, 0
    %p103 = por %p101, %p102
    %p104 = scmp.ne.s32.totalorder %s93, %s96
    %p105 = scmp.eq.s32.totalorder %s15, 1
    %p106 = por %p104, %p105
    %p107 = scmp.ne.s32.totalorder %s96, %s97
    %p108 = scmp.eq.s32.totalorder %s15, 0
    %p109 = por %p107, %p108
    %p110 = scmp.ne.s32.totalorder %s96, %s97
    %p111 = scmp.eq.s32.totalorder %s16, 1
    %p112 = por %p110, %p111
    %p114 = scmp.ne.s32.totalorder %s97, %s113
    %p115 = scmp.eq.s32.totalorder %s16, 0
    %p116 = por %p114, %p115
    %s117 = ssub.s32 %s10, %s17
    %p118 = scmp.eq.s32.totalorder %s117, 0
    %s120 = sadd.s32 %s119, 1
    %s121 = scalar_select %p118, %s119, %s120
    %p124 = pneg %p118
    %p125 = scmp.eq.s32.totalorder %s10, 1
    %p126 = por %p124, %p125
    %p127 = scmp.ne.s32.totalorder %s119, %s122
    %p128 = scmp.eq.s32.totalorder %s10, 0
    %p129 = por %p127, %p128
    %p130 = scmp.ne.s32.totalorder %s119, %s122
    %p131 = scmp.eq.s32.totalorder %s15, 1
    %p132 = por %p130, %p131
    %p133 = scmp.ne.s32.totalorder %s122, %s123
    %p134 = scmp.eq.s32.totalorder %s15, 0
    %p135 = por %p133, %p134
    %p136 = scmp.ne.s32.totalorder %s122, %s123
    %p137 = scmp.eq.s32.totalorder %s16, 1
    %p138 = por %p136, %p137
    %p140 = scmp.ne.s32.totalorder %s123, %s139
    %p141 = scmp.eq.s32.totalorder %s16, 0
    %p142 = por %p140, %p141
    %p143 = scmp.le.s32.totalorder 1, %s10
    %p144 = scmp.lt.s32.totalorder %s10, 3
    %p145 = pnand %p143, %p144
    %p146 = pneg %p145
    // Predicated region
    $region9: #{adaconv2d_forward.1} parent=5 // pred_check
      _
    $region10: #{adaconv2d_forward.1} parent=5 // pred_check_branch
      %148 = sbr.rel (%p145) target = $region12
    $region11: #{adaconv2d_forward.1} parent=5 // pred_region
      %s149 = ssub.s32 %s10, 1
      // Predicated region
      $region13: #{adaconv2d_forward.1} parent=11 // pred_check
        %p150 = pneg %p83
      $region14: #{adaconv2d_forward.1} parent=11 // pred_check_branch
        %152 = sbr.rel (%p150) target = $region16
      $region15: #{adaconv2d_forward.1} parent=11 // pred_region
        _
      $region16: #{adaconv2d_forward.1} parent=11 // pred_fallthru
        _
    $region12: #{adaconv2d_forward.1} parent=5 // pred_fallthru
      _
    %p153 = scmp.lt.s32.totalorder %s10, 2
    // Predicated region
    $region17: #{adaconv2d_forward.1} parent=5 // pred_check
      %p154 = pneg %p153
    $region18: #{adaconv2d_forward.1} parent=5 // pred_check_branch
      %156 = sbr.rel (%p154) target = $region20
    $region19: #{adaconv2d_forward.1} parent=5 // pred_region
      // Predicated region
      $region21: #{adaconv2d_forward.1} parent=19 // pred_check
        %p157 = pneg %p30
      $region22: #{adaconv2d_forward.1} parent=19 // pred_check_branch
        %159 = sbr.rel (%p157) target = $region24
      $region23: #{adaconv2d_forward.1} parent=19 // pred_region
        %p160 = scmp.lt.s32.totalorder %s10, 1
        %s161 = scalar_select %p160, %s10, 1
        %s162 = smul.addr %s161, 3
        %s163 = smul.addr %s162, 8
        %s164 = scalar_lea.vmem %s0, %s163
      $region24: #{adaconv2d_forward.1} parent=19 // pred_fallthru
        _
      // Predicated region
      $region25: #{adaconv2d_forward.1} parent=19 // pred_check
        %p165 = pneg %p56
      $region26: #{adaconv2d_forward.1} parent=19 // pred_check_branch
        %167 = sbr.rel (%p165) target = $region28
      $region27: #{adaconv2d_forward.1} parent=19 // pred_region
        %p168 = scmp.lt.s32.totalorder %s10, 1
        %s169 = scalar_select %p168, %s10, 1
        %s170 = smul.addr %s169, 4
        %s171 = scalar_lea.vmem %s1, %s170
      $region28: #{adaconv2d_forward.1} parent=19 // pred_fallthru
        _
      // Predicated region
      $region29: #{adaconv2d_forward.1} parent=19 // pred_check
        %p172 = pneg %p103
      $region30: #{adaconv2d_forward.1} parent=19 // pred_check_branch
        %174 = sbr.rel (%p172) target = $region32
      $region31: #{adaconv2d_forward.1} parent=19 // pred_region
        %p175 = scmp.lt.s32.totalorder %s10, 1
        %s176 = scalar_select %p175, %s10, 1
        %s177 = smul.addr %s176, 8
        %s178 = scalar_lea.vmem %s3, %s177
      $region32: #{adaconv2d_forward.1} parent=19 // pred_fallthru
        _
    $region20: #{adaconv2d_forward.1} parent=5 // pred_fallthru
      _
    %p179 = scmp.le.s32.totalorder 1, %s10
    %p180 = scmp.lt.s32.totalorder %s10, 3
    %p181 = pnand %p179, %p180
    %p182 = pneg %p181
    // Predicated region
    $region33: #{adaconv2d_forward.1} parent=5 // pred_check
      _
    $region34: #{adaconv2d_forward.1} parent=5 // pred_check_branch
      %184 = sbr.rel (%p181) target = $region36
    $region35: #{adaconv2d_forward.1} parent=5 // pred_region
      %s185 = ssub.s32 %s10, 1
      %p186 = scmp.lt.s32.totalorder %s15, 1
      %s187 = scalar_select %p186, %s15, 1
      %s188 = smul.addr %s187, 3
      %s189 = smul.addr %s188, 8
      %s190 = scalar_lea.vmem %s0, %s189
      %p191 = pneg %p36
      %p192 = pneg %p33
      %p193 = scmp.lt.s32.totalorder %s15, 1
      %s194 = scalar_select %p193, %s15, 1
      %s195 = smul.addr %s194, 4
      %s196 = scalar_lea.vmem %s1, %s195
      %p197 = pneg %p62
      %p198 = pneg %p59
      %p199 = pneg %p83
      %p200 = pneg %p80
      %p201 = scmp.lt.s32.totalorder %s15, 1
      %s202 = scalar_select %p201, %s15, 1
      %s203 = smul.addr %s202, 8
      %s204 = scalar_lea.vmem %s3, %s203
      %p205 = pneg %p109
      %p206 = pneg %p106
      %p207 = pneg %p135
      %p208 = pneg %p132
      %p209 = scmp.lt.s32.totalorder %s15, 1
      %s210 = scalar_select %p209, %s15, 1
      %s211 = smul.addr %s210, 3
      %s212 = smul.addr %s211, 8
      %s213 = scalar_lea.vmem %s4, %s212
      %p214 = scmp.lt.s32.totalorder %s15, 1
      %s215 = scalar_select %p214, %s15, 1
      %s216 = smul.addr %s215, 3
      %s217 = smul.addr %s216, 8
      %s218 = scalar_lea.vmem %s0, %s217
      %p219 = scmp.lt.s32.totalorder %s15, 1
      %s220 = scalar_select %p219, %s15, 1
      %s221 = smul.addr %s220, 4
      %s222 = scalar_lea.vmem %s1, %s221
      %p223 = scmp.lt.s32.totalorder %s15, 1
      %s224 = scalar_select %p223, %s15, 1
      %s225 = smul.addr %s224, 8
      %s226 = scalar_lea.vmem %s3, %s225
      %p227 = scmp.lt.s32.totalorder %s15, 1
      %s228 = scalar_select %p227, %s15, 1
      %s229 = smul.addr %s228, 3
      %s230 = smul.addr %s229, 8
      %s231 = scalar_lea.vmem %s4, %s230
      %v233 = vld [vmem:[%s218] sm:$0xff]
      %v234 = vld [vmem:[%s218 + $0x8] sm:$0xff]
      %v235 = vld [vmem:[%s218 + $0x10] sm:$0xff]
      %v236 = vld [vmem:[%s222] sm:$0xf]
      %v237 = vld [vmem:[%s2] sm:$0xf]
      %v238 = vld [vmem:[%s226] sm:$0xff]
      %v239 = vlaneseq
      %v240 = vand.u32 %v239, 127
      %v241 = vadd.s32 %v240, 128
      %v242 = vadd.s32 %v240, 256
      %v243 = vcvt.s32.f32 %v240
      %v244 = vcvt.s32.f32 %v241
      %v245 = vcvt.s32.f32 %v242
      %v246 = vadd.f32 %v243, 0.5
      %v247 = vadd.f32 %v244, 0.5
      %v248 = vadd.f32 %v245, 0.5
      %v249 = vmul.f32 %v246, 0.055555556
      %v250 = vmul.f32 %v247, 0.055555556
      %v251 = vmul.f32 %v248, 0.055555556
      %v252 = vfloor.f32 %v249
      %v253 = vfloor.f32 %v250
      %v254 = vfloor.f32 %v251
      %v255 = vmul.f32 %v252, 18.0
      %v256 = vmul.f32 %v253, 18.0
      %v257 = vmul.f32 %v254, 18.0
      %v258 = vsub.f32 %v243, %v255
      %v259 = vsub.f32 %v244, %v256
      %v260 = vsub.f32 %v245, %v257
      %vm261 = vcmp.ge.f32.partialorder %v252, 1.0
      %vm262 = vcmp.ge.f32.partialorder %v253, 1.0
      %vm263 = vcmp.ge.f32.partialorder %v254, 1.0
      %vm264 = vcmp.le.f32.partialorder %v252, 16.0
      %vm265 = vcmp.le.f32.partialorder %v253, 16.0
      %vm266 = vcmp.le.f32.partialorder %v254, 16.0
      %vm267 = vmand %vm261, %vm264
      %vm268 = vmand %vm262, %vm265
      %vm269 = vmand %vm263, %vm266
      %vm270 = vcmp.ge.f32.partialorder %v258, 1.0
      %vm271 = vcmp.ge.f32.partialorder %v259, 1.0
      %vm272 = vcmp.ge.f32.partialorder %v260, 1.0
      %vm273 = vmand %vm267, %vm270
      %vm274 = vmand %vm268, %vm271
      %vm275 = vmand %vm269, %vm272
      %vm276 = vcmp.le.f32.partialorder %v258, 16.0
      %vm277 = vcmp.le.f32.partialorder %v259, 16.0
      %vm278 = vcmp.le.f32.partialorder %v260, 16.0
      %vm279 = vmand %vm273, %vm276
      %vm280 = vmand %vm274, %vm277
      %vm281 = vmand %vm275, %vm278
      %v282 = vsel %vm279, 1, 0
      %v283 = vsel %vm280, 1, 0
      %v284 = vsel %vm281, 1, 0
      %v285 = vcvt.s32.f32 %v282
      %v286 = vcvt.s32.f32 %v283
      %v287 = vcvt.s32.f32 %v284
      %v288 = vmul.f32 %v233, %v285
      %v289 = vmul.f32 %v234, %v286
      %v290 = vmul.f32 %v235, %v287
      %v291 = vadd.f32 %v288, %v289
      %v292 = vadd.f32 %v291, %v290
      %293 = vadd.xlane.f32.xlu0 %v292
      %v294 = vpop.xlane.xlu0 %293
      %v295 = vmul.f32 %v294, 0.00390625
      %v296 = vsub.f32 %v233, %v295
      %v297 = vsub.f32 %v234, %v295
      %v298 = vsub.f32 %v235, %v295
      %v299 = vmul.f32 %v296, %v285
      %v300 = vmul.f32 %v297, %v286
      %v301 = vmul.f32 %v298, %v287
      %v302 = vmul.f32 %v299, %v299
      %v303 = vmul.f32 %v300, %v300
      %v304 = vmul.f32 %v301, %v301
      %v305 = vadd.f32 %v302, %v303
      %v306 = vadd.f32 %v305, %v304
      %307 = vadd.xlane.f32.xlu0 %v306
      %v308 = vpop.xlane.xlu0 %307
      %v309 = vmul.f32 %v308, 0.00390625
      %v310 = vadd.f32 %v309, 1e-05
      %v311 = vrsqrt.pop %v310
      %v312 = vmul.f32 %v296, %v311
      %v313 = vmul.f32 %v297, %v311
      %v314 = vmul.f32 %v298, %v311
      %315 = vrot.lane.b32.xlu0 %v312, 19
      %v316 = vpop.permute.xlu0 %315
      %317 = vrot.lane.b32.xlu0 %v313, 19
      %v318 = vpop.permute.xlu0 %317
      %319 = vrot.lane.b32.xlu0 %v314, 19
      %v320 = vpop.permute.xlu0 %319
      %vm321 = vcmp.lt.s32.totalorder %v240, 19
      %v322 = vsel %vm321, %v318, %v320
      %v323 = vsel %vm321, %v316, %v318
      %v324 = vsel %vm321, %v320, %v316
      %325 = vrot.lane.b32.xlu0 %v312, 18
      %v326 = vpop.permute.xlu0 %325
      %327 = vrot.lane.b32.xlu0 %v313, 18
      %v328 = vpop.permute.xlu0 %327
      %329 = vrot.lane.b32.xlu0 %v314, 18
      %v330 = vpop.permute.xlu0 %329
      %vm331 = vcmp.lt.s32.totalorder %v240, 18
      %v332 = vsel %vm331, %v328, %v330
      %v333 = vsel %vm331, %v326, %v328
      %v334 = vsel %vm331, %v330, %v326
      %335 = vrot.lane.b32.xlu0 %v312, 17
      %v336 = vpop.permute.xlu0 %335
      %337 = vrot.lane.b32.xlu0 %v313, 17
      %v338 = vpop.permute.xlu0 %337
      %339 = vrot.lane.b32.xlu0 %v314, 17
      %v340 = vpop.permute.xlu0 %339
      %vm341 = vcmp.lt.s32.totalorder %v240, 17
      %v342 = vsel %vm341, %v338, %v340
      %v343 = vsel %vm341, %v336, %v338
      %v344 = vsel %vm341, %v340, %v336
      %345 = vrot.lane.b32.xlu0 %v312, 1
      %v346 = vpop.permute.xlu0 %345
      %347 = vrot.lane.b32.xlu0 %v313, 1
      %v348 = vpop.permute.xlu0 %347
      %349 = vrot.lane.b32.xlu0 %v314, 1
      %v350 = vpop.permute.xlu0 %349
      %vm351 = vcmp.lt.s32.totalorder %v240, 1
      %v352 = vsel %vm351, %v348, %v350
      %v353 = vsel %vm351, %v346, %v348
      %v354 = vsel %vm351, %v350, %v346
      %355 = vrot.lane.b32.xlu0 %v312, 127
      %v356 = vpop.permute.xlu0 %355
      %357 = vrot.lane.b32.xlu0 %v313, 127
      %v358 = vpop.permute.xlu0 %357
      %359 = vrot.lane.b32.xlu0 %v314, 127
      %v360 = vpop.permute.xlu0 %359
      %vm361 = vcmp.lt.s32.totalorder %v240, 127
      %v362 = vsel %vm361, %v358, %v360
      %v363 = vsel %vm361, %v356, %v358
      %v364 = vsel %vm361, %v360, %v356
      %365 = vrot.lane.b32.xlu0 %v312, 111
      %v366 = vpop.permute.xlu0 %365
      %367 = vrot.lane.b32.xlu0 %v313, 111
      %v368 = vpop.permute.xlu0 %367
      %369 = vrot.lane.b32.xlu0 %v314, 111
      %v370 = vpop.permute.xlu0 %369
      %vm371 = vcmp.lt.s32.totalorder %v240, 111
      %v372 = vsel %vm371, %v368, %v370
      %v373 = vsel %vm371, %v366, %v368
      %v374 = vsel %vm371, %v370, %v366
      %375 = vrot.lane.b32.xlu0 %v312, 110
      %v376 = vpop.permute.xlu0 %375
      %377 = vrot.lane.b32.xlu0 %v313, 110
      %v378 = vpop.permute.xlu0 %377
      %379 = vrot.lane.b32.xlu0 %v314, 110
      %v380 = vpop.permute.xlu0 %379
      %vm381 = vcmp.lt.s32.totalorder %v240, 110
      %v382 = vsel %vm381, %v378, %v380
      %v383 = vsel %vm381, %v376, %v378
      %v384 = vsel %vm381, %v380, %v376
      %385 = vrot.lane.b32.xlu0 %v312, 109
      %v386 = vpop.permute.xlu0 %385
      %387 = vrot.lane.b32.xlu0 %v313, 109
      %v388 = vpop.permute.xlu0 %387
      %389 = vrot.lane.b32.xlu0 %v314, 109
      %v390 = vpop.permute.xlu0 %389
      %vm391 = vcmp.lt.s32.totalorder %v240, 109
      %v392 = vsel %vm391, %v388, %v390
      %v393 = vsel %vm391, %v386, %v388
      %v394 = vsel %vm391, %v390, %v386
      %v395 = vpack.c.bf16 %v334, %v324
      %v396 = vpack.c.bf16 %v333, %v323
      %v397 = vpack.c.bf16 %v332, %v322
      %v398 = vpack.c.bf16 %v354, %v344
      %v399 = vpack.c.bf16 %v353, %v343
      %v400 = vpack.c.bf16 %v352, %v342
      %v401 = vpack.c.bf16 %v363, %v312
      %v402 = vpack.c.bf16 %v362, %v313
      %v403 = vpack.c.bf16 %v364, %v314
      %v404 = vpack.c.bf16 %v383, %v373
      %v405 = vpack.c.bf16 %v382, %v372
      %v406 = vpack.c.bf16 %v384, %v374
      %v407 = vpack.c.bf16 %v393, %v393
      %v408 = vpack.c.bf16 %v392, %v392
      %v409 = vpack.c.bf16 %v394, %v394
      %vm410 = vcmask 588800
      %v412 = vsel %vm410, %v236, 0
      %vm414 = vcmask 1043456
      %v416 = vsel %vm414, %v407, 0
      %v419 = vsel %vm414, %v408, 0
      %v422 = vsel %vm414, %v409, 0
      %424 = vmatprep.subr.bf16.mxu0 %v396
      %425 = vmatpush1.bf16.msra.mxu0 %v395
      %426 = vmatprep.subr.bf16.mxu0 %v399
      %427 = vmatpush1.bf16.msra.mxu0 %v398
      %428 = vmatprep.subr.bf16.mxu0 %v402
      %429 = vmatpush1.bf16.msra.mxu0 %v401
      %430 = vmatprep.subr.bf16.mxu0 %v405
      %431 = vmatpush1.bf16.msra.mxu0 %v404
      %432 = vmatprep.subr.bf16.mxu0 %v419
      %433 = vmatpush1.bf16.msra.mxu0 %v416
      %434 = vmatprep.subr.bf16.mxu0 0
      %435 = vmatpush1.bf16.msra.mxu0 0
      %436 = vmatprep.subr.bf16.mxu0 0
      %437 = vmatpush1.bf16.msra.mxu0 0
      %438 = vmatprep.subr.bf16.mxu0 0
      %439 = vmatpush1.bf16.msra.mxu0 0
      %440 = vmatprep.subr.bf16.mxu0 0
      %441 = vmatpush1.bf16.msra.mxu0 0
      %442 = vmatprep.subr.bf16.mxu0 0
      %443 = vmatpush1.bf16.msra.mxu0 0
      %444 = vmatprep.subr.bf16.mxu0 0
      %445 = vmatpush1.bf16.msra.mxu0 0
      %446 = vmatprep.subr.bf16.mxu0 0
      %447 = vmatpush1.bf16.msra.mxu0 0
      %448 = vmatprep.subr.bf16.mxu0 0
      %449 = vmatpush1.bf16.msra.mxu0 0
      %450 = vmatprep.subr.bf16.mxu0 0
      %451 = vmatpush1.bf16.msra.mxu0 0
      %452 = vmatprep.subr.bf16.mxu0 0
      %453 = vmatpush1.bf16.msra.mxu0 0
      %454 = vmatprep.subr.bf16.mxu0 0
      %455 = vmatpush1.bf16.msra.mxu0 0
      %456 = vmatprep.mubr.bf16.mxu0 0
      %457 = vmatmul.mubr.bf16.gmra.mrb[0].mxu0 %v412
      %v458 = vpop.f32.mrb[0].mxu0
      %v459 = vadd.f32 0.0, %v458
      %v460 = vpop.f32.mrb[0].mxu0
      %v461 = vadd.f32 0.0, %v460
      %v462 = vpop.f32.mrb[0].mxu0
      %v463 = vpop.f32.mrb[0].mxu0
      %464 = vdwg.mxu0
      %465 = vmatprep.subr.bf16.mxu0 0
      %466 = vmatpush1.bf16.msra.mxu0 %v397
      %467 = vmatprep.subr.bf16.mxu0 0
      %468 = vmatpush1.bf16.msra.mxu0 %v400
      %469 = vmatprep.subr.bf16.mxu0 0
      %470 = vmatpush1.bf16.msra.mxu0 %v403
      %471 = vmatprep.subr.bf16.mxu0 0
      %472 = vmatpush1.bf16.msra.mxu0 %v406
      %473 = vmatprep.subr.bf16.mxu0 0
      %474 = vmatpush1.bf16.msra.mxu0 %v422
      %475 = vmatprep.subr.bf16.mxu0 0
      %476 = vmatpush1.bf16.msra.mxu0 0
      %477 = vmatprep.subr.bf16.mxu0 0
      %478 = vmatpush1.bf16.msra.mxu0 0
      %479 = vmatprep.subr.bf16.mxu0 0
      %480 = vmatpush1.bf16.msra.mxu0 0
      %481 = vmatprep.subr.bf16.mxu0 0
      %482 = vmatpush1.bf16.msra.mxu0 0
      %483 = vmatprep.subr.bf16.mxu0 0
      %484 = vmatpush1.bf16.msra.mxu0 0
      %485 = vmatprep.subr.bf16.mxu0 0
      %486 = vmatpush1.bf16.msra.mxu0 0
      %487 = vmatprep.subr.bf16.mxu0 0
      %488 = vmatpush1.bf16.msra.mxu0 0
      %489 = vmatprep.subr.bf16.mxu0 0
      %490 = vmatpush1.bf16.msra.mxu0 0
      %491 = vmatprep.subr.bf16.mxu0 0
      %492 = vmatpush1.bf16.msra.mxu0 0
      %493 = vmatprep.subr.bf16.mxu0 0
      %494 = vmatpush1.bf16.msra.mxu0 0
      %495 = vmatprep.subr.bf16.mxu0 0
      %496 = vmatpush1.bf16.msra.mxu0 0
      %497 = vmatprep.mubr.bf16.mxu0 0
      %498 = vmatmul.mubr.bf16.gmra.mrb[0].mxu0 %v412
      %v499 = vpop.f32.mrb[0].mxu0
      %v500 = vadd.f32 0.0, %v499
      %v501 = vpop.f32.mrb[0].mxu0
      %v502 = vpop.f32.mrb[0].mxu0
      %v503 = vpop.f32.mrb[0].mxu0
      %504 = vdwg.mxu0
      %vm505 = vcmp.eq.f32.partialorder %v258, 0.0
      %vm506 = vcmp.eq.f32.partialorder %v259, 0.0
      %vm507 = vcmp.eq.f32.partialorder %v260, 0.0
      %508 = vrot.lane.b32.xlu0 %v459, 126
      %v509 = vpop.permute.xlu0 %508
      %510 = vrot.lane.b32.xlu0 %v461, 126
      %v511 = vpop.permute.xlu0 %510
      %512 = vrot.lane.b32.xlu0 %v500, 126
      %v513 = vpop.permute.xlu0 %512
      %vm514 = vcmp.lt.s32.totalorder %v240, 126
      %v515 = vsel %vm514, %v511, %v513
      %v516 = vsel %vm514, %v509, %v511
      %v517 = vsel %vm514, %v513, %v509
      %v518 = vsel %vm505, 1, 0
      %v519 = vsel %vm506, 1, 0
      %v520 = vsel %vm507, 1, 0
      %vm521 = vcmp.eq.s32.totalorder %v518, 1
      %vm522 = vcmp.eq.s32.totalorder %v519, 1
      %vm523 = vcmp.eq.s32.totalorder %v520, 1
      %v524 = vsel %vm521, %v516, %v459
      %v525 = vsel %vm522, %v515, %v461
      %v526 = vsel %vm523, %v517, %v500
      %vm527 = vcmp.eq.f32.partialorder %v258, 17.0
      %vm528 = vcmp.eq.f32.partialorder %v259, 17.0
      %vm529 = vcmp.eq.f32.partialorder %v260, 17.0
      %530 = vrot.lane.b32.xlu0 %v459, 2
      %v531 = vpop.permute.xlu0 %530
      %532 = vrot.lane.b32.xlu0 %v461, 2
      %v533 = vpop.permute.xlu0 %532
      %534 = vrot.lane.b32.xlu0 %v500, 2
      %v535 = vpop.permute.xlu0 %534
      %vm536 = vcmp.lt.s32.totalorder %v240, 2
      %v537 = vsel %vm536, %v533, %v535
      %v538 = vsel %vm536, %v531, %v533
      %v539 = vsel %vm536, %v535, %v531
      %v540 = vsel %vm527, 1, 0
      %v541 = vsel %vm528, 1, 0
      %v542 = vsel %vm529, 1, 0
      %vm543 = vcmp.eq.s32.totalorder %v540, 1
      %vm544 = vcmp.eq.s32.totalorder %v541, 1
      %vm545 = vcmp.eq.s32.totalorder %v542, 1
      %v546 = vsel %vm543, %v539, %v524
      %v547 = vsel %vm544, %v538, %v525
      %v548 = vsel %vm545, %v537, %v526
      %vm549 = vcmp.eq.f32.partialorder %v252, 0.0
      %vm550 = vcmp.eq.f32.partialorder %v253, 0.0
      %vm551 = vcmp.eq.f32.partialorder %v254, 0.0
      %552 = vrot.lane.b32.xlu0 %v546, 92
      %v553 = vpop.permute.xlu0 %552
      %554 = vrot.lane.b32.xlu0 %v547, 92
      %v555 = vpop.permute.xlu0 %554
      %556 = vrot.lane.b32.xlu0 %v548, 92
      %v557 = vpop.permute.xlu0 %556
      %vm558 = vcmp.lt.s32.totalorder %v240, 92
      %v559 = vsel %vm558, %v555, %v557
      %v560 = vsel %vm558, %v553, %v555
      %v561 = vsel %vm558, %v557, %v553
      %v562 = vsel %vm549, 1, 0
      %v563 = vsel %vm550, 1, 0
      %v564 = vsel %vm551, 1, 0
      %vm565 = vcmp.eq.s32.totalorder %v562, 1
      %vm566 = vcmp.eq.s32.totalorder %v563, 1
      %vm567 = vcmp.eq.s32.totalorder %v564, 1
      %v568 = vsel %vm565, %v560, %v546
      %v569 = vsel %vm566, %v559, %v547
      %v570 = vsel %vm567, %v561, %v548
      %vm571 = vcmp.eq.f32.partialorder %v252, 17.0
      %vm572 = vcmp.eq.f32.partialorder %v253, 17.0
      %vm573 = vcmp.eq.f32.partialorder %v254, 17.0
      %574 = vrot.lane.b32.xlu0 %v546, 36
      %v575 = vpop.permute.xlu0 %574
      %576 = vrot.lane.b32.xlu0 %v547, 36
      %v577 = vpop.permute.xlu0 %576
      %578 = vrot.lane.b32.xlu0 %v548, 36
      %v579 = vpop.permute.xlu0 %578
      %vm580 = vcmp.lt.s32.totalorder %v240, 36
      %v581 = vsel %vm580, %v577, %v579
      %v582 = vsel %vm580, %v575, %v577
      %v583 = vsel %vm580, %v579, %v575
      %v584 = vsel %vm571, 1, 0
      %v585 = vsel %vm572, 1, 0
      %v586 = vsel %vm573, 1, 0
      %vm587 = vcmp.eq.s32.totalorder %v584, 1
      %vm588 = vcmp.eq.s32.totalorder %v585, 1
      %vm589 = vcmp.eq.s32.totalorder %v586, 1
      %v590 = vsel %vm587, %v583, %v568
      %v591 = vsel %vm588, %v582, %v569
      %v592 = vsel %vm589, %v581, %v570
      %593 = vrot.lane.b32.xlu0 %v590, 127
      %v594 = vpop.permute.xlu0 %593
      %595 = vrot.lane.b32.xlu0 %v591, 127
      %v596 = vpop.permute.xlu0 %595
      %597 = vrot.lane.b32.xlu0 %v592, 127
      %v598 = vpop.permute.xlu0 %597
      %v599 = vsel %vm361, %v596, %v598
      %v600 = vsel %vm361, %v594, %v596
      %v601 = vsel %vm361, %v598, %v594
      %602 = vrot.lane.b32.xlu0 %v590, 126
      %v603 = vpop.permute.xlu0 %602
      %604 = vrot.lane.b32.xlu0 %v591, 126
      %v605 = vpop.permute.xlu0 %604
      %606 = vrot.lane.b32.xlu0 %v592, 126
      %v607 = vpop.permute.xlu0 %606
      %v608 = vsel %vm514, %v605, %v607
      %v609 = vsel %vm514, %v603, %v605
      %v610 = vsel %vm514, %v607, %v603
      %611 = vrot.lane.b32.xlu0 %v590, 110
      %v612 = vpop.permute.xlu0 %611
      %613 = vrot.lane.b32.xlu0 %v591, 110
      %v614 = vpop.permute.xlu0 %613
      %615 = vrot.lane.b32.xlu0 %v592, 110
      %v616 = vpop.permute.xlu0 %615
      %v617 = vsel %vm381, %v614, %v616
      %v618 = vsel %vm381, %v612, %v614
      %v619 = vsel %vm381, %v616, %v612
      %620 = vrot.lane.b32.xlu0 %v590, 109
      %v621 = vpop.permute.xlu0 %620
      %622 = vrot.lane.b32.xlu0 %v591, 109
      %v623 = vpop.permute.xlu0 %622
      %624 = vrot.lane.b32.xlu0 %v592, 109
      %v625 = vpop.permute.xlu0 %624
      %v626 = vsel %vm391, %v623, %v625
      %v627 = vsel %vm391, %v621, %v623
      %v628 = vsel %vm391, %v625, %v621
      %629 = vrot.lane.b32.xlu0 %v590, 108
      %v630 = vpop.permute.xlu0 %629
      %631 = vrot.lane.b32.xlu0 %v591, 108
      %v632 = vpop.permute.xlu0 %631
      %633 = vrot.lane.b32.xlu0 %v592, 108
      %v634 = vpop.permute.xlu0 %633
      %vm635 = vcmp.lt.s32.totalorder %v240, 108
      %v636 = vsel %vm635, %v632, %v634
      %v637 = vsel %vm635, %v630, %v632
      %v638 = vsel %vm635, %v634, %v630
      %639 = vrot.lane.b32.xlu0 %v590, 92
      %v640 = vpop.permute.xlu0 %639
      %641 = vrot.lane.b32.xlu0 %v591, 92
      %v642 = vpop.permute.xlu0 %641
      %643 = vrot.lane.b32.xlu0 %v592, 92
      %v644 = vpop.permute.xlu0 %643
      %v645 = vsel %vm558, %v642, %v644
      %v646 = vsel %vm558, %v640, %v642
      %v647 = vsel %vm558, %v644, %v640
      %648 = vrot.lane.b32.xlu0 %v590, 91
      %v649 = vpop.permute.xlu0 %648
      %650 = vrot.lane.b32.xlu0 %v591, 91
      %v651 = vpop.permute.xlu0 %650
      %652 = vrot.lane.b32.xlu0 %v592, 91
      %v653 = vpop.permute.xlu0 %652
      %vm654 = vcmp.lt.s32.totalorder %v240, 91
      %v655 = vsel %vm654, %v651, %v653
      %v656 = vsel %vm654, %v649, %v651
      %v657 = vsel %vm654, %v653, %v649
      %658 = vrot.lane.b32.xlu0 %v590, 90
      %v659 = vpop.permute.xlu0 %658
      %660 = vrot.lane.b32.xlu0 %v591, 90
      %v661 = vpop.permute.xlu0 %660
      %662 = vrot.lane.b32.xlu0 %v592, 90
      %v663 = vpop.permute.xlu0 %662
      %vm664 = vcmp.lt.s32.totalorder %v240, 90
      %v665 = vsel %vm664, %v661, %v663
      %v666 = vsel %vm664, %v659, %v661
      %v667 = vsel %vm664, %v663, %v659
      %v668 = vpack.c.bf16 %v600, %v590
      %v669 = vpack.c.bf16 %v599, %v591
      %v670 = vpack.c.bf16 %v601, %v592
      %v671 = vpack.c.bf16 %v618, %v609
      %v672 = vpack.c.bf16 %v617, %v608
      %v673 = vpack.c.bf16 %v619, %v610
      %v674 = vpack.c.bf16 %v637, %v627
      %v675 = vpack.c.bf16 %v636, %v626
      %v676 = vpack.c.bf16 %v638, %v628
      %v677 = vpack.c.bf16 %v656, %v646
      %v678 = vpack.c.bf16 %v655, %v645
      %v679 = vpack.c.bf16 %v657, %v647
      %v680 = vpack.c.bf16 %v666, %v666
      %v681 = vpack.c.bf16 %v665, %v665
      %v682 = vpack.c.bf16 %v667, %v667
      %684 = vset.pattern.permute.xlu0 0
      %685 = vperm.xlu0 %684, %v238
      %v686 = vpop.permute.xlu0 %685
      %v689 = vsel %vm410, %v237, 0
      %v692 = vsel %vm414, %v680, 0
      %v695 = vsel %vm414, %v681, 0
      %v698 = vsel %vm414, %v682, 0
      %700 = vmatprep.subr.bf16.mxu0 %v669
      %701 = vmatpush1.bf16.msra.mxu0 %v668
      %702 = vmatprep.subr.bf16.mxu0 %v672
      %703 = vmatpush1.bf16.msra.mxu0 %v671
      %704 = vmatprep.subr.bf16.mxu0 %v675
      %705 = vmatpush1.bf16.msra.mxu0 %v674
      %706 = vmatprep.subr.bf16.mxu0 %v678
      %707 = vmatpush1.bf16.msra.mxu0 %v677
      %708 = vmatprep.subr.bf16.mxu0 %v695
      %709 = vmatpush1.bf16.msra.mxu0 %v692
      %710 = vmatprep.subr.bf16.mxu0 0
      %711 = vmatpush1.bf16.msra.mxu0 0
      %712 = vmatprep.subr.bf16.mxu0 0
      %713 = vmatpush1.bf16.msra.mxu0 0
      %714 = vmatprep.subr.bf16.mxu0 0
      %715 = vmatpush1.bf16.msra.mxu0 0
      %716 = vmatprep.subr.bf16.mxu0 0
      %717 = vmatpush1.bf16.msra.mxu0 0
      %718 = vmatprep.subr.bf16.mxu0 0
      %719 = vmatpush1.bf16.msra.mxu0 0
      %720 = vmatprep.subr.bf16.mxu0 0
      %721 = vmatpush1.bf16.msra.mxu0 0
      %722 = vmatprep.subr.bf16.mxu0 0
      %723 = vmatpush1.bf16.msra.mxu0 0
      %724 = vmatprep.subr.bf16.mxu0 0
      %725 = vmatpush1.bf16.msra.mxu0 0
      %726 = vmatprep.subr.bf16.mxu0 0
      %727 = vmatpush1.bf16.msra.mxu0 0
      %728 = vmatprep.subr.bf16.mxu0 0
      %729 = vmatpush1.bf16.msra.mxu0 0
      %730 = vmatprep.subr.bf16.mxu0 0
      %731 = vmatpush1.bf16.msra.mxu0 0
      %732 = vmatprep.mubr.bf16.mxu0 0
      %733 = vmatmul.mubr.bf16.gmra.mrb[0].mxu0 %v689
      %v734 = vpop.f32.mrb[0].mxu0
      %v735 = vadd.f32 %v686, %v734
      %v736 = vpop.f32.mrb[0].mxu0
      %v737 = vadd.f32 %v686, %v736
      %v738 = vpop.f32.mrb[0].mxu0
      %v739 = vpop.f32.mrb[0].mxu0
      %740 = vdwg.mxu0
      %741 = vmatprep.subr.bf16.mxu0 0
      %742 = vmatpush1.bf16.msra.mxu0 %v670
      %743 = vmatprep.subr.bf16.mxu0 0
      %744 = vmatpush1.bf16.msra.mxu0 %v673
      %745 = vmatprep.subr.bf16.mxu0 0
      %746 = vmatpush1.bf16.msra.mxu0 %v676
      %747 = vmatprep.subr.bf16.mxu0 0
      %748 = vmatpush1.bf16.msra.mxu0 %v679
      %749 = vmatprep.subr.bf16.mxu0 0
      %750 = vmatpush1.bf16.msra.mxu0 %v698
      %751 = vmatprep.subr.bf16.mxu0 0
      %752 = vmatpush1.bf16.msra.mxu0 0
      %753 = vmatprep.subr.bf16.mxu0 0
      %754 = vmatpush1.bf16.msra.mxu0 0
      %755 = vmatprep.subr.bf16.mxu0 0
      %756 = vmatpush1.bf16.msra.mxu0 0
      %757 = vmatprep.subr.bf16.mxu0 0
      %758 = vmatpush1.bf16.msra.mxu0 0
      %759 = vmatprep.subr.bf16.mxu0 0
      %760 = vmatpush1.bf16.msra.mxu0 0
      %761 = vmatprep.subr.bf16.mxu0 0
      %762 = vmatpush1.bf16.msra.mxu0 0
      %763 = vmatprep.subr.bf16.mxu0 0
      %764 = vmatpush1.bf16.msra.mxu0 0
      %765 = vmatprep.subr.bf16.mxu0 0
      %766 = vmatpush1.bf16.msra.mxu0 0
      %767 = vmatprep.subr.bf16.mxu0 0
      %768 = vmatpush1.bf16.msra.mxu0 0
      %769 = vmatprep.subr.bf16.mxu0 0
      %770 = vmatpush1.bf16.msra.mxu0 0
      %771 = vmatprep.subr.bf16.mxu0 0
      %772 = vmatpush1.bf16.msra.mxu0 0
      %773 = vmatprep.mubr.bf16.mxu0 0
      %774 = vmatmul.mubr.bf16.gmra.mrb[0].mxu0 %v689
      %v775 = vpop.f32.mrb[0].mxu0
      %v776 = vadd.f32 %v686, %v775
      %v777 = vpop.f32.mrb[0].mxu0
      %v778 = vpop.f32.mrb[0].mxu0
      %v779 = vpop.f32.mrb[0].mxu0
      %780 = vdwg.mxu0
      %781 = vst [vmem:[%s231] sm:$0xff] %v735
      %782 = vst [vmem:[%s231 + $0x8] sm:$0xff] %v737
      %783 = vst [vmem:[%s231 + $0x10] sm:$0xff] %v776
      %p784 = scmp.lt.s32.totalorder %s15, 1
      %s785 = scalar_select %p784, %s15, 1
      %s786 = smul.addr %s785, 3
      %s787 = smul.addr %s786, 8
      %s788 = scalar_lea.vmem %s4, %s787
      // Predicated region
      $region37: #{adaconv2d_forward.1} parent=35 // pred_check
        %p789 = pneg %p132
      $region38: #{adaconv2d_forward.1} parent=35 // pred_check_branch
        %791 = sbr.rel (%p789) target = $region40
      $region39: #{adaconv2d_forward.1} parent=35 // pred_region
        _
      $region40: #{adaconv2d_forward.1} parent=35 // pred_fallthru
        _
    $region36: #{adaconv2d_forward.1} parent=5 // pred_fallthru
      _
    %p792 = scmp.le.s32.totalorder 2, %s10
    // Predicated region
    $region41: #{adaconv2d_forward.1} parent=5 // pred_check
      %p793 = pneg %p792
    $region42: #{adaconv2d_forward.1} parent=5 // pred_check_branch
      %795 = sbr.rel (%p793) target = $region44
    $region43: #{adaconv2d_forward.1} parent=5 // pred_region
      %s796 = ssub.s32 %s10, 2
      // Predicated region
      $region45: #{adaconv2d_forward.1} parent=43 // pred_check
        %p797 = pneg %p138
      $region46: #{adaconv2d_forward.1} parent=43 // pred_check_branch
        %799 = sbr.rel (%p797) target = $region48
      $region47: #{adaconv2d_forward.1} parent=43 // pred_region
        %p800 = scmp.lt.s32.totalorder %s16, 1
        %s801 = scalar_select %p800, %s16, 1
        %s802 = smul.addr %s801, 3
        %s803 = smul.addr %s802, 8
        %s804 = scalar_lea.vmem %s4, %s803
      $region48: #{adaconv2d_forward.1} parent=43 // pred_fallthru
        _
    $region44: #{adaconv2d_forward.1} parent=5 // pred_fallthru
      _
  $region6: #{adaconv2d_forward.1} parent=0 // loop_footer
    %s14 = sadd.s32 1, %s10
  $region7: #{adaconv2d_forward.1} parent=0 // loop_footer_branch
    %9 = sbr.rel target = $region3
  $region8: #{adaconv2d_forward.1} parent=0 // loop_exit
    _

</llo_original>
